<compile_context>
chip_gen: v7x
topology: tpu7x:2x2x1
jax: 0.10.0
libtpu: 0.0.40
codegen_flags: <defaults>
</compile_context>

<pallas_src>
import jax
import jax.numpy as jnp
from jax.experimental import pallas as pl
from jax.experimental.pallas import tpu as pltpu

K = 28 * 28          # 784 input features (kept unpadded in HBM)
H = 128              # hidden width
OUT_RAW = 10         # logits
OUT_PAD = 128        # lane-dense padded output width (cols 10..127 are zeros)
_SUBLANE = 16        # block sublane multiple valid for both f32 (8) and bf16 (16)


def _round_up(x, m):
    return ((x + m - 1) // m) * m


def mlp_kernel(x_ref, w1_ref, b1_ref, w2_ref, b2_ref, w3_ref, b3_ref, o_ref):
    # Layer 1: Linear(784 -> 128).  bf16 operands, f32 MXU accumulation,
    # f32 bias-add (no activation after layer 1, per the module).
    h = jnp.dot(x_ref[...], w1_ref[...],
                preferred_element_type=jnp.float32) + b1_ref[...]
    # Layer 2: Linear(128 -> 128) followed by ReLU (ReLU in f32).
    h = jnp.dot(h.astype(w2_ref.dtype), w2_ref[...],
                preferred_element_type=jnp.float32) + b2_ref[...]
    h = jnp.maximum(h, 0.0)
    # Output head: Linear(128 -> 128); columns 10..127 carry zero weights/bias.
    o_ref[...] = (jnp.dot(h.astype(w3_ref.dtype), w3_ref[...],
                          preferred_element_type=jnp.float32)
                  + b3_ref[...]).astype(o_ref.dtype)


def neural_net_forward(x, prepared_params, *, tb=2048, return_padded=False):
    """NeuralNet forward pass.

    x: any array whose trailing dims flatten to 784 (e.g. (B, 1, 28, 28)).
    Returns (B, 10) f32 logits, or the lane-dense (B, 128) slab if
    return_padded=True (lets a downstream consumer fuse/skip the final slice).
    """
    w1, b1, w2, b2, w3, b3 = prepared_params

    # x.view(-1, 784): metadata-only reshape (no HBM copy).
    x2d = x.reshape(-1, K)
    # Stream activations in bf16: halves HBM traffic of the dominant tensor and
    # uses the native bf16 MXU path on v6e/v7x.  (Ideally the producer emits
    # bf16 directly, in which case this cast is a no-op.)
    x2d = x2d.astype(jnp.bfloat16)
    B = x2d.shape[0]

    # Batch tile: large enough to amortize the ~0.35 us/step grid overhead, but
    # capped so the grid has >= ~4 steps when B allows (megacore sharding on
    # v7x).  Multiple of 16 satisfies the bf16 sublane layout; tiny batches use
    # a full-extent block, which is always legal.
    if B <= _SUBLANE:
        tb_eff = B
    else:
        tb_eff = min(tb, _round_up(pl.cdiv(B, 4), _SUBLANE))
    # Ragged last tile: overhang rows are read as garbage but their outputs are
    # dropped on the store, so no batch padding copy is needed.
    grid = (pl.cdiv(B, tb_eff),)

    flops = 2 * B * (K * H + H * H + H * OUT_PAD)
    bytes_accessed = (x2d.dtype.itemsize * B * K + 4 * B * OUT_PAD
                      + w1.dtype.itemsize * (K * H + H * H + H * OUT_PAD)
                      + 4 * (H + H + OUT_PAD))

    resident = lambda i: (0, 0)   # weights/biases: fetched once, VMEM-resident
    # NOTE(perf review): pipeline_mode=pl.Buffered(1) on the resident specs
    # would drop their unused second pipeline buffer (~0.3 MiB total).  The
    # constant index_maps already prevent any re-DMA across grid steps and VMEM
    # is far from its limit here, so it is omitted for API robustness.

    out = pl.pallas_call(
        mlp_kernel,
        out_shape=jax.ShapeDtypeStruct((B, OUT_PAD), jnp.float32),
        grid=grid,
        in_specs=[
            pl.BlockSpec((tb_eff, K), lambda i: (i, 0)),   # streamed x tile (bf16)
            pl.BlockSpec((K, H), resident),                # w1 (bf16, unpadded K)
            pl.BlockSpec((1, H), resident),                # b1 (f32)
            pl.BlockSpec((H, H), resident),                # w2 (bf16)
            pl.BlockSpec((1, H), resident),                # b2 (f32)
            pl.BlockSpec((H, OUT_PAD), resident),          # w3 padded (bf16)
            pl.BlockSpec((1, OUT_PAD), resident),          # b3 padded (f32)
        ],
        out_specs=pl.BlockSpec((tb_eff, OUT_PAD), lambda i: (i, 0)),
        compiler_params=pltpu.CompilerParams(
            dimension_semantics=("parallel",),
            vmem_limit_bytes=32 * 1024 * 1024),
        cost_estimate=pl.CostEstimate(
            flops=flops, transcendentals=0, bytes_accessed=bytes_accessed),
    )(x2d, w1, b1, w2, b2, w3, b3)

    if return_padded:
        return out            # (B, 128) lane-dense slab; cols 10..127 are zero
    return out[:, :OUT_RAW]   # (B, 10)


def _linear_init(key, fan_in, fan_out):
    """Deterministic PyTorch-style nn.Linear init: U(-1/sqrt(fan_in), 1/sqrt(fan_in))."""
    kw, kb = jax.random.split(key)
    bound = 1.0 / jnp.sqrt(jnp.float32(fan_in))
    # stored as (in, out) so the kernel computes x @ W
    w = jax.random.uniform(kw, (fan_in, fan_out), jnp.float32, -bound, bound)
    b = jax.random.uniform(kb, (1, fan_out), jnp.float32, -bound, bound)
    return w, b


def init_params(key):
    k1, k2, k3 = jax.random.split(key, 3)
    w1, b1 = _linear_init(k1, K, H)
    w2, b2 = _linear_init(k2, H, H)
    w3, b3 = _linear_init(k3, H, OUT_RAW)
    return (w1, b1, w2, b2, w3, b3)


def prepare_params(params):
    """One-time prep: weights -> bf16 (streamed dtype), head padded 10 -> 128
    output columns with zeros (lane-dense store); biases stay f32 because they
    add into the f32 accumulator."""
    w1, b1, w2, b2, w3, b3 = params
    w3p = jnp.pad(w3, ((0, 0), (0, OUT_PAD - OUT_RAW)))
    b3p = jnp.pad(b3, ((0, 0), (0, OUT_PAD - OUT_RAW)))
    return (w1.astype(jnp.bfloat16), b1,
            w2.astype(jnp.bfloat16), b2,
            w3p.astype(jnp.bfloat16), b3p)


def _reference_f32(x, params):
    w1, b1, w2, b2, w3, b3 = params
    h = x.reshape(-1, K) @ w1 + b1
    h = h @ w2 + b2
    h = jnp.maximum(h, 0.0)
    return h @ w3 + b3


def _reference_bf16(x, params):
    """Plain-JAX mirror of the kernel's mixed-precision path."""
    w1, b1, w2, b2, w3, b3 = params
    bf = jnp.bfloat16
    xb = x.reshape(-1, K).astype(bf)
    h = jnp.dot(xb, w1.astype(bf), preferred_element_type=jnp.float32) + b1
    h = jnp.dot(h.astype(bf), w2.astype(bf), preferred_element_type=jnp.float32) + b2
    h = jnp.maximum(h, 0.0)
    return jnp.dot(h.astype(bf), w3.astype(bf), preferred_element_type=jnp.float32) + b3


if __name__ == "__main__":
    key = jax.random.PRNGKey(0)
    kx, kx2, kp = jax.random.split(key, 3)

    params = init_params(kp)
    prepared = prepare_params(params)

    # Small MNIST-like batch, NCHW like the PyTorch module expects.
    x = jax.random.normal(kx, (2, 1, 28, 28), jnp.float32)
    out = neural_net_forward(x, prepared)
    jax.block_until_ready(out)
    assert out.shape == (2, OUT_RAW)
    # Tight check against a plain-JAX mirror of the same mixed-precision path,
    # loose check against the pure-f32 reference (bf16 streaming error budget).
    assert jnp.allclose(out, _reference_bf16(x, params), atol=5e-3, rtol=5e-3)
    assert jnp.allclose(out, _reference_f32(x, params), atol=3e-2, rtol=3e-2)

    # Ragged batch: not a tile multiple -> multi-step grid + partial last tile.
    xb = jax.random.normal(kx2, (200, 1, 28, 28), jnp.float32)
    outb = neural_net_forward(xb, prepared)
    jax.block_until_ready(outb)
    assert outb.shape == (200, OUT_RAW)
    assert jnp.allclose(outb, _reference_bf16(xb, params), atol=5e-3, rtol=5e-3)
    assert jnp.allclose(outb, _reference_f32(xb, params), atol=3e-2, rtol=3e-2)

    print("KERNEL_OK")
</pallas_src>

<mosaic_0001>
module attributes {stable_mosaic.version = 11 : i64} {
  func.func @mlp_kernel(%arg0: i32, %arg1: memref<2x784xbf16, #tpu.memory_space<vmem>>, %arg2: memref<784x128xbf16, #tpu.memory_space<vmem>>, %arg3: memref<1x128xf32, #tpu.memory_space<vmem>>, %arg4: memref<128x128xbf16, #tpu.memory_space<vmem>>, %arg5: memref<1x128xf32, #tpu.memory_space<vmem>>, %arg6: memref<128x128xbf16, #tpu.memory_space<vmem>>, %arg7: memref<1x128xf32, #tpu.memory_space<vmem>>, %arg8: memref<2x128xf32, #tpu.memory_space<vmem>>) attributes {dimension_semantics = [#tpu.dimension_semantics<parallel>], iteration_bounds = array<i64: 1>, scalar_prefetch = 0 : i64, scratch_operands = 0 : i64, tpu.core_type = #tpu.core_type<tc>, window_params = [{transform_indices = @transform_0, window_bounds = array<i64: 2, 784>}, {pipeline_mode = #tpu.pipeline_mode<synchronous>, transform_indices = @transform_1, window_bounds = array<i64: 784, 128>}, {pipeline_mode = #tpu.pipeline_mode<synchronous>, transform_indices = @transform_2, window_bounds = array<i64: 1, 128>}, {pipeline_mode = #tpu.pipeline_mode<synchronous>, transform_indices = @transform_3, window_bounds = array<i64: 128, 128>}, {pipeline_mode = #tpu.pipeline_mode<synchronous>, transform_indices = @transform_4, window_bounds = array<i64: 1, 128>}, {pipeline_mode = #tpu.pipeline_mode<synchronous>, transform_indices = @transform_5, window_bounds = array<i64: 128, 128>}, {pipeline_mode = #tpu.pipeline_mode<synchronous>, transform_indices = @transform_6, window_bounds = array<i64: 1, 128>}, {transform_indices = @transform_7, window_bounds = array<i64: 2, 128>}]} {
    %c0 = arith.constant 0 : index
    %c0_0 = arith.constant 0 : index
    %0 = vector.load %arg1[%c0, %c0_0] : memref<2x784xbf16, #tpu.memory_space<vmem>>, vector<2x784xbf16>
    %c0_1 = arith.constant 0 : index
    %c0_2 = arith.constant 0 : index
    %1 = vector.load %arg2[%c0_1, %c0_2] : memref<784x128xbf16, #tpu.memory_space<vmem>>, vector<784x128xbf16>
    %cst = arith.constant dense<0.000000e+00> : vector<2x128xf32>
    %2 = tpu.matmul %0, %1, %cst {dimension_numbers = #tpu.dot_dimension_numbers<[1], [0], [0], [1], [0, 0, 1, 1], [], []>} : vector<2x784xbf16>, vector<784x128xbf16>, vector<2x128xf32> -> vector<2x128xf32>
    %c0_3 = arith.constant 0 : index
    %c0_4 = arith.constant 0 : index
    %3 = vector.load %arg3[%c0_3, %c0_4] : memref<1x128xf32, #tpu.memory_space<vmem>>, vector<1x128xf32>
    %4 = vector.broadcast %3 : vector<1x128xf32> to vector<2x128xf32>
    %5 = arith.addf %2, %4 : vector<2x128xf32>
    %6 = arith.truncf %5 : vector<2x128xf32> to vector<2x128xbf16>
    %c0_5 = arith.constant 0 : index
    %c0_6 = arith.constant 0 : index
    %7 = vector.load %arg4[%c0_5, %c0_6] : memref<128x128xbf16, #tpu.memory_space<vmem>>, vector<128x128xbf16>
    %cst_7 = arith.constant dense<0.000000e+00> : vector<2x128xf32>
    %8 = tpu.matmul %6, %7, %cst_7 {dimension_numbers = #tpu.dot_dimension_numbers<[1], [0], [0], [1], [0, 0, 1, 1], [], []>} : vector<2x128xbf16>, vector<128x128xbf16>, vector<2x128xf32> -> vector<2x128xf32>
    %c0_8 = arith.constant 0 : index
    %c0_9 = arith.constant 0 : index
    %9 = vector.load %arg5[%c0_8, %c0_9] : memref<1x128xf32, #tpu.memory_space<vmem>>, vector<1x128xf32>
    %10 = vector.broadcast %9 : vector<1x128xf32> to vector<2x128xf32>
    %11 = arith.addf %8, %10 : vector<2x128xf32>
    %cst_10 = arith.constant 0.000000e+00 : f32
    %12 = vector.broadcast %cst_10 : f32 to vector<2x128xf32>
    %13 = arith.maximumf %11, %12 : vector<2x128xf32>
    %14 = arith.truncf %13 : vector<2x128xf32> to vector<2x128xbf16>
    %c0_11 = arith.constant 0 : index
    %c0_12 = arith.constant 0 : index
    %15 = vector.load %arg6[%c0_11, %c0_12] : memref<128x128xbf16, #tpu.memory_space<vmem>>, vector<128x128xbf16>
    %cst_13 = arith.constant dense<0.000000e+00> : vector<2x128xf32>
    %16 = tpu.matmul %14, %15, %cst_13 {dimension_numbers = #tpu.dot_dimension_numbers<[1], [0], [0], [1], [0, 0, 1, 1], [], []>} : vector<2x128xbf16>, vector<128x128xbf16>, vector<2x128xf32> -> vector<2x128xf32>
    %c0_14 = arith.constant 0 : index
    %c0_15 = arith.constant 0 : index
    %17 = vector.load %arg7[%c0_14, %c0_15] : memref<1x128xf32, #tpu.memory_space<vmem>>, vector<1x128xf32>
    %18 = vector.broadcast %17 : vector<1x128xf32> to vector<2x128xf32>
    %19 = arith.addf %16, %18 : vector<2x128xf32>
    %c0_16 = arith.constant 0 : index
    %c0_17 = arith.constant 0 : index
    %20 = vector.load %arg8[%c0_16, %c0_17] : memref<2x128xf32, #tpu.memory_space<vmem>>, vector<2x128xf32>
    tpu.vector_store %arg8[%c0_16, %c0_17], %19 {strides = array<i32>} : memref<2x128xf32, #tpu.memory_space<vmem>>, vector<2x128xf32>,
    return
  }
  func.func @transform_0(%arg0: i32) -> (i32, i32) {
    %c0_i32 = arith.constant 0 : i32
    %c0_i32_0 = arith.constant 0 : i32
    return %arg0, %c0_i32 : i32, i32
  }
  func.func @transform_1(%arg0: i32) -> (i32, i32) {
    %c0_i32 = arith.constant 0 : i32
    %c0_i32_0 = arith.constant 0 : i32
    %c0_i32_1 = arith.constant 0 : i32
    return %c0_i32, %c0_i32_0 : i32, i32
  }
  func.func @transform_2(%arg0: i32) -> (i32, i32) {
    %c0_i32 = arith.constant 0 : i32
    %c0_i32_0 = arith.constant 0 : i32
    %c0_i32_1 = arith.constant 0 : i32
    return %c0_i32, %c0_i32_0 : i32, i32
  }
  func.func @transform_3(%arg0: i32) -> (i32, i32) {
    %c0_i32 = arith.constant 0 : i32
    %c0_i32_0 = arith.constant 0 : i32
    %c0_i32_1 = arith.constant 0 : i32
    return %c0_i32, %c0_i32_0 : i32, i32
  }
  func.func @transform_4(%arg0: i32) -> (i32, i32) {
    %c0_i32 = arith.constant 0 : i32
    %c0_i32_0 = arith.constant 0 : i32
    %c0_i32_1 = arith.constant 0 : i32
    return %c0_i32, %c0_i32_0 : i32, i32
  }
  func.func @transform_5(%arg0: i32) -> (i32, i32) {
    %c0_i32 = arith.constant 0 : i32
    %c0_i32_0 = arith.constant 0 : i32
    %c0_i32_1 = arith.constant 0 : i32
    return %c0_i32, %c0_i32_0 : i32, i32
  }
  func.func @transform_6(%arg0: i32) -> (i32, i32) {
    %c0_i32 = arith.constant 0 : i32
    %c0_i32_0 = arith.constant 0 : i32
    %c0_i32_1 = arith.constant 0 : i32
    return %c0_i32, %c0_i32_0 : i32, i32
  }
  func.func @transform_7(%arg0: i32) -> (i32, i32) {
    %c0_i32 = arith.constant 0 : i32
    %c0_i32_0 = arith.constant 0 : i32
    return %arg0, %c0_i32 : i32, i32
  }
}

</mosaic_0001>

<llo_original>
// kernel: tpu_custom_call.1
$region0: #{tpu_custom_call.1}
  #allocation0 [shape = 'u32[]', space=smem, size = 0x4, offset = 0x4, fixed_abs, tag = 'smem constant byte address 0x4 - core index']
  #allocation1 [shape = 'u32[144,128]{1,0:T(1,128)}', space=vmem, size = 0x12000, scoped, tag = 'internal scratch']
  %s0 = inlined_call_operand.hbm [shape: bf16[2,784], index: 0, kind: input, shape index: {}]
  %s1 = inlined_call_operand.hbm [shape: bf16[784,128], index: 1, kind: input, shape index: {}]
  %s2 = inlined_call_operand.vmem [shape: f32[1,128], index: 2, kind: input, shape index: {}]
  %s3 = inlined_call_operand.hbm [shape: bf16[128,128], index: 3, kind: input, shape index: {}]
  %s4 = inlined_call_operand.vmem [shape: f32[1,128], index: 4, kind: input, shape index: {}]
  %s5 = inlined_call_operand.hbm [shape: bf16[128,128], index: 5, kind: input, shape index: {}]
  %s6 = inlined_call_operand.vmem [shape: f32[1,128], index: 6, kind: input, shape index: {}]
  %s7 = inlined_call_operand.hbm [shape: f32[2,128], index: 7, kind: output, shape index: {}]
  %s8 = sld [smem:[#allocation0]]
  $region54: #{tpu_custom_call.1} parent=0
    _
  %s10 = ssub.s32 1, %s8
  %s11 = scalar_select 0, %s10, %s8
  $region1: #{tpu_custom_call.1} parent=0
    #allocation2 [shape = 'u8[3584]{0}', space=vmem, size = 0x1000, scoped, tag = 'input window, operand 0, single buffered']
    #allocation3 [shape = 's32[1]{0}', space=sflag, size = 0x4, scoped, tag = 'scoped memory for tpu_custom_call.1']
    #allocation4 [shape = 's32[1]{0}', space=sflag, size = 0x4, scoped, tag = 'scoped memory for tpu_custom_call.1']
    #allocation5 [shape = 'u8[200704]{0}', space=vmem, size = 0x31000, scoped, tag = 'input window, operand 1, single buffered']
    #allocation6 [shape = 's32[1]{0}', space=sflag, size = 0x4, scoped, tag = 'scoped memory for tpu_custom_call.1']
    #allocation7 [shape = 'u8[32768]{0}', space=vmem, size = 0x8000, scoped, tag = 'input window, operand 3, single buffered']
    #allocation8 [shape = 'u8[32768]{0}', space=vmem, size = 0x8000, scoped, tag = 'input window, operand 5, single buffered']
    #allocation9 [shape = 's32[1]{0}', space=sflag, size = 0x4, scoped, tag = 'scoped memory for tpu_custom_call.1']
    #allocation10 [shape = 'u8[1024]{0}', space=vmem, size = 0x400, scoped, tag = 'output window, operand 0, single buffered']
    %12 = vsyncpa [#allocation3], 0
    %13 = vsyncpa [#allocation6], 0
    %14 = vsyncpa [#allocation9], 0
    %15 = vsyncpa [#allocation4], 0
    // Predicated region
    $region2: #{tpu_custom_call.1} parent=1 // pred_check
      _
    $region3: #{tpu_custom_call.1} parent=1 // pred_check_branch
      %17 = sbr.rel (0) target = $region5
    $region4: #{tpu_custom_call.1} parent=1 // pred_region
      %s19 = ssub.s32 112, 112
      %20 = vsyncadd [#allocation3], %s19
      %s22 = sshll.u32 [#allocation2], 4
      %s23 = int_to_ptr.vmem [resolvable:$true] %s22
      %25 = dma.hbm_to_vmem [thread:$0]  %s0, 112, %s23, [#allocation3]
    $region5: #{tpu_custom_call.1} parent=1 // pred_fallthru
      _
    // Predicated region
    $region6: #{tpu_custom_call.1} parent=1 // pred_check
      _
    $region7: #{tpu_custom_call.1} parent=1 // pred_check_branch
      %27 = sbr.rel (0) target = $region9
    $region8: #{tpu_custom_call.1} parent=1 // pred_region
      %s29 = ssub.s32 6272, 6272
      %30 = vsyncadd [#allocation6], %s29
      %s31 = sshll.u32 [#allocation5], 4
      %s32 = int_to_ptr.vmem [resolvable:$true] %s31
      %37 = dma.hbm_to_vmem [thread:$0]  %s1, 6272, %s32, [#allocation6], 64, 64, 4
    $region9: #{tpu_custom_call.1} parent=1 // pred_fallthru
      _
    // Predicated region
    $region10: #{tpu_custom_call.1} parent=1 // pred_check
      _
    $region11: #{tpu_custom_call.1} parent=1 // pred_check_branch
      %39 = sbr.rel (0) target = $region13
    $region12: #{tpu_custom_call.1} parent=1 // pred_region
      _
    $region13: #{tpu_custom_call.1} parent=1 // pred_fallthru
      _
    // Predicated region
    $region14: #{tpu_custom_call.1} parent=1 // pred_check
      _
    $region15: #{tpu_custom_call.1} parent=1 // pred_check_branch
      %41 = sbr.rel (0) target = $region17
    $region16: #{tpu_custom_call.1} parent=1 // pred_region
      %s43 = ssub.s32 1024, 1024
      %44 = vsyncadd [#allocation6], %s43
      %s45 = sshll.u32 [#allocation7], 4
      %s46 = int_to_ptr.vmem [resolvable:$true] %s45
      %51 = dma.hbm_to_vmem [thread:$0]  %s3, 1024, %s46, [#allocation6], 64, 64, 4
    $region17: #{tpu_custom_call.1} parent=1 // pred_fallthru
      _
    // Predicated region
    $region18: #{tpu_custom_call.1} parent=1 // pred_check
      _
    $region19: #{tpu_custom_call.1} parent=1 // pred_check_branch
      %53 = sbr.rel (0) target = $region21
    $region20: #{tpu_custom_call.1} parent=1 // pred_region
      _
    $region21: #{tpu_custom_call.1} parent=1 // pred_fallthru
      _
    // Predicated region
    $region22: #{tpu_custom_call.1} parent=1 // pred_check
      _
    $region23: #{tpu_custom_call.1} parent=1 // pred_check_branch
      %55 = sbr.rel (0) target = $region25
    $region24: #{tpu_custom_call.1} parent=1 // pred_region
      %s57 = ssub.s32 1024, 1024
      %58 = vsyncadd [#allocation9], %s57
      %s59 = sshll.u32 [#allocation8], 4
      %s60 = int_to_ptr.vmem [resolvable:$true] %s59
      %65 = dma.hbm_to_vmem [thread:$0]  %s5, 1024, %s60, [#allocation9], 64, 64, 4
    $region25: #{tpu_custom_call.1} parent=1 // pred_fallthru
      _
    // Predicated region
    $region26: #{tpu_custom_call.1} parent=1 // pred_check
      _
    $region27: #{tpu_custom_call.1} parent=1 // pred_check_branch
      %67 = sbr.rel (0) target = $region29
    $region28: #{tpu_custom_call.1} parent=1 // pred_region
      _
    $region29: #{tpu_custom_call.1} parent=1 // pred_fallthru
      _
    // Predicated region
    $region30: #{tpu_custom_call.1} parent=1 // pred_check
      _
    $region31: #{tpu_custom_call.1} parent=1 // pred_check_branch
      %69 = sbr.rel (0) target = $region33
    $region32: #{tpu_custom_call.1} parent=1 // pred_region
      %70 = dma.done [#allocation3], 112
    $region33: #{tpu_custom_call.1} parent=1 // pred_fallthru
      _
    // Predicated region
    $region34: #{tpu_custom_call.1} parent=1 // pred_check
      _
    $region35: #{tpu_custom_call.1} parent=1 // pred_check_branch
      %72 = sbr.rel (0) target = $region37
    $region36: #{tpu_custom_call.1} parent=1 // pred_region
      %73 = dma.done [#allocation6], 6272
    $region37: #{tpu_custom_call.1} parent=1 // pred_fallthru
      _
    // Predicated region
    $region38: #{tpu_custom_call.1} parent=1 // pred_check
      _
    $region39: #{tpu_custom_call.1} parent=1 // pred_check_branch
      %75 = sbr.rel (0) target = $region41
    $region40: #{tpu_custom_call.1} parent=1 // pred_region
      %76 = dma.done [#allocation6], 1024
    $region41: #{tpu_custom_call.1} parent=1 // pred_fallthru
      _
    // Predicated region
    $region42: #{tpu_custom_call.1} parent=1 // pred_check
      _
    $region43: #{tpu_custom_call.1} parent=1 // pred_check_branch
      %78 = sbr.rel (0) target = $region45
    $region44: #{tpu_custom_call.1} parent=1 // pred_region
      %79 = dma.done [#allocation9], 1024
    $region45: #{tpu_custom_call.1} parent=1 // pred_fallthru
      _
    %v81 = vld [vmem:[#allocation2] sm:$0x7f]
    %v82 = vld [vmem:[#allocation5] sm:$0xf]
    %v83 = vld [vmem:[#allocation5 + $0x4] sm:$0xf]
    %v84 = vld [vmem:[#allocation5 + $0x8] sm:$0xf]
    %v85 = vld [vmem:[#allocation5 + $0xc] sm:$0xf]
    %v86 = vld [vmem:[#allocation5 + $0x10] sm:$0xf]
    %v87 = vld [vmem:[#allocation5 + $0x14] sm:$0xf]
    %v88 = vld [vmem:[#allocation5 + $0x18] sm:$0xf]
    %v89 = vld [vmem:[#allocation5 + $0x1c] sm:$0xf]
    %v90 = vld [vmem:[#allocation5 + $0x20] sm:$0xf]
    %v91 = vld [vmem:[#allocation5 + $0x24] sm:$0xf]
    %v92 = vld [vmem:[#allocation5 + $0x28] sm:$0xf]
    %v93 = vld [vmem:[#allocation5 + $0x2c] sm:$0xf]
    %v94 = vld [vmem:[#allocation5 + $0x30] sm:$0xf]
    %v95 = vld [vmem:[#allocation5 + $0x34] sm:$0xf]
    %v96 = vld [vmem:[#allocation5 + $0x38] sm:$0xf]
    %v97 = vld [vmem:[#allocation5 + $0x3c] sm:$0xf]
    %v98 = vld [vmem:[#allocation5 + $0x40] sm:$0xf]
    %v99 = vld [vmem:[#allocation5 + $0x44] sm:$0xf]
    %v100 = vld [vmem:[#allocation5 + $0x48] sm:$0xf]
    %v101 = vld [vmem:[#allocation5 + $0x4c] sm:$0xf]
    %v102 = vld [vmem:[#allocation5 + $0x50] sm:$0xf]
    %v103 = vld [vmem:[#allocation5 + $0x54] sm:$0xf]
    %v104 = vld [vmem:[#allocation5 + $0x58] sm:$0xf]
    %v105 = vld [vmem:[#allocation5 + $0x5c] sm:$0xf]
    %v106 = vld [vmem:[#allocation5 + $0x60] sm:$0xf]
    %v107 = vld [vmem:[#allocation5 + $0x64] sm:$0xf]
    %v108 = vld [vmem:[#allocation5 + $0x68] sm:$0xf]
    %v109 = vld [vmem:[#allocation5 + $0x6c] sm:$0xf]
    %v110 = vld [vmem:[#allocation5 + $0x70] sm:$0xf]
    %v111 = vld [vmem:[#allocation5 + $0x74] sm:$0xf]
    %v112 = vld [vmem:[#allocation5 + $0x78] sm:$0xf]
    %v113 = vld [vmem:[#allocation5 + $0x7c] sm:$0xf]
    %v114 = vld [vmem:[#allocation5 + $0x80] sm:$0xf]
    %v115 = vld [vmem:[#allocation5 + $0x84] sm:$0xf]
    %v116 = vld [vmem:[#allocation5 + $0x88] sm:$0xf]
    %v117 = vld [vmem:[#allocation5 + $0x8c] sm:$0xf]
    %v118 = vld [vmem:[#allocation5 + $0x90] sm:$0xf]
    %v119 = vld [vmem:[#allocation5 + $0x94] sm:$0xf]
    %v120 = vld [vmem:[#allocation5 + $0x98] sm:$0xf]
    %v121 = vld [vmem:[#allocation5 + $0x9c] sm:$0xf]
    %v122 = vld [vmem:[#allocation5 + $0xa0] sm:$0xf]
    %v123 = vld [vmem:[#allocation5 + $0xa4] sm:$0xf]
    %v124 = vld [vmem:[#allocation5 + $0xa8] sm:$0xf]
    %v125 = vld [vmem:[#allocation5 + $0xac] sm:$0xf]
    %v126 = vld [vmem:[#allocation5 + $0xb0] sm:$0xf]
    %v127 = vld [vmem:[#allocation5 + $0xb4] sm:$0xf]
    %v128 = vld [vmem:[#allocation5 + $0xb8] sm:$0xf]
    %v129 = vld [vmem:[#allocation5 + $0xbc] sm:$0xf]
    %v130 = vld [vmem:[#allocation5 + $0xc0] sm:$0xf]
    %v131 = vld [vmem:[#allocation5 + $0xc4] sm:$0xf]
    %v132 = vld [vmem:[#allocation5 + $0xc8] sm:$0xf]
    %v133 = vld [vmem:[#allocation5 + $0xcc] sm:$0xf]
    %v134 = vld [vmem:[#allocation5 + $0xd0] sm:$0xf]
    %v135 = vld [vmem:[#allocation5 + $0xd4] sm:$0xf]
    %v136 = vld [vmem:[#allocation5 + $0xd8] sm:$0xf]
    %v137 = vld [vmem:[#allocation5 + $0xdc] sm:$0xf]
    %v138 = vld [vmem:[#allocation5 + $0xe0] sm:$0xf]
    %v139 = vld [vmem:[#allocation5 + $0xe4] sm:$0xf]
    %v140 = vld [vmem:[#allocation5 + $0xe8] sm:$0xf]
    %v141 = vld [vmem:[#allocation5 + $0xec] sm:$0xf]
    %v142 = vld [vmem:[#allocation5 + $0xf0] sm:$0xf]
    %v143 = vld [vmem:[#allocation5 + $0xf4] sm:$0xf]
    %v144 = vld [vmem:[#allocation5 + $0xf8] sm:$0xf]
    %v145 = vld [vmem:[#allocation5 + $0xfc] sm:$0xf]
    %v146 = vld [vmem:[#allocation5 + $0x100] sm:$0xf]
    %v147 = vld [vmem:[#allocation5 + $0x104] sm:$0xf]
    %v148 = vld [vmem:[#allocation5 + $0x108] sm:$0xf]
    %v149 = vld [vmem:[#allocation5 + $0x10c] sm:$0xf]
    %v150 = vld [vmem:[#allocation5 + $0x110] sm:$0xf]
    %v151 = vld [vmem:[#allocation5 + $0x114] sm:$0xf]
    %v152 = vld [vmem:[#allocation5 + $0x118] sm:$0xf]
    %v153 = vld [vmem:[#allocation5 + $0x11c] sm:$0xf]
    %v154 = vld [vmem:[#allocation5 + $0x120] sm:$0xf]
    %v155 = vld [vmem:[#allocation5 + $0x124] sm:$0xf]
    %v156 = vld [vmem:[#allocation5 + $0x128] sm:$0xf]
    %v157 = vld [vmem:[#allocation5 + $0x12c] sm:$0xf]
    %v158 = vld [vmem:[#allocation5 + $0x130] sm:$0xf]
    %v159 = vld [vmem:[#allocation5 + $0x134] sm:$0xf]
    %v160 = vld [vmem:[#allocation5 + $0x138] sm:$0xf]
    %v161 = vld [vmem:[#allocation5 + $0x13c] sm:$0xf]
    %v162 = vld [vmem:[#allocation5 + $0x140] sm:$0xf]
    %v163 = vld [vmem:[#allocation5 + $0x144] sm:$0xf]
    %v164 = vld [vmem:[#allocation5 + $0x148] sm:$0xf]
    %v165 = vld [vmem:[#allocation5 + $0x14c] sm:$0xf]
    %v166 = vld [vmem:[#allocation5 + $0x150] sm:$0xf]
    %v167 = vld [vmem:[#allocation5 + $0x154] sm:$0xf]
    %v168 = vld [vmem:[#allocation5 + $0x158] sm:$0xf]
    %v169 = vld [vmem:[#allocation5 + $0x15c] sm:$0xf]
    %v170 = vld [vmem:[#allocation5 + $0x160] sm:$0xf]
    %v171 = vld [vmem:[#allocation5 + $0x164] sm:$0xf]
    %v172 = vld [vmem:[#allocation5 + $0x168] sm:$0xf]
    %v173 = vld [vmem:[#allocation5 + $0x16c] sm:$0xf]
    %v174 = vld [vmem:[#allocation5 + $0x170] sm:$0xf]
    %v175 = vld [vmem:[#allocation5 + $0x174] sm:$0xf]
    %v176 = vld [vmem:[#allocation5 + $0x178] sm:$0xf]
    %v177 = vld [vmem:[#allocation5 + $0x17c] sm:$0xf]
    %v178 = vld [vmem:[#allocation5 + $0x180] sm:$0xf]
    %v179 = vld [vmem:[#allocation5 + $0x184] sm:$0xf]
    %v180 = vld [vmem:[%s2] sm:$0x1]
    %v182 = vlaneseq
    %v183 = vshrl.u32 %v182, 7
    %v184 = vsub.s32 0, %v183
    %v185 = vrot.slane %v180, %v184
    %v188 = vcombine.high %v81, %v81
    %v190 = vunpack.c.l.s4 1966171168
    %v191 = vunpack.c.0.s8 %v190
    %v192 = vlaneseq
    %v193 = vshrl.u32 %v192, 7
    %v194 = vsub.s32 %v191, %v193
    %v195 = vrot.slane %v81, %v194
    %v197 = vunpack.c.l.s4 1966171168
    %v198 = vunpack.c.0.s8 %v197
    %v199 = vlaneseq
    %v200 = vshrl.u32 %v199, 7
    %v201 = vsub.s32 %v198, %v200
    %v202 = vrot.slane %v188, %v201
    %v203 = vcombine.high %v195, %v195
    %v204 = vcombine.high %v202, %v202
    %v206 = vunpack.c.l.s4 1966171168
    %v207 = vunpack.c.0.s8 %v206
    %v208 = vlaneseq
    %v209 = vshrl.u32 %v208, 7
    %v210 = vsub.s32 %v207, %v209
    %v211 = vrot.slane %v195, %v210
    %v213 = vunpack.c.l.s4 1966171168
    %v214 = vunpack.c.0.s8 %v213
    %v215 = vlaneseq
    %v216 = vshrl.u32 %v215, 7
    %v217 = vsub.s32 %v214, %v216
    %v218 = vrot.slane %v202, %v217
    %v220 = vunpack.c.l.s4 1966171168
    %v221 = vunpack.c.0.s8 %v220
    %v222 = vlaneseq
    %v223 = vshrl.u32 %v222, 7
    %v224 = vsub.s32 %v221, %v223
    %v225 = vrot.slane %v203, %v224
    %v227 = vunpack.c.l.s4 1966171168
    %v228 = vunpack.c.0.s8 %v227
    %v229 = vlaneseq
    %v230 = vshrl.u32 %v229, 7
    %v231 = vsub.s32 %v228, %v230
    %v232 = vrot.slane %v204, %v231
    %v233 = vcombine.high %v211, %v211
    %v234 = vcombine.high %v218, %v218
    %v235 = vcombine.high %v225, %v225
    %v340 = vunpack.c.l.b16 %v82
    %v341 = vunpack.c.l.b16 %v83
    %v342 = vunpack.c.l.b16 %v84
    %v343 = vunpack.c.l.b16 %v85
    %v344 = vunpack.c.l.b16 %v86
    %v345 = vunpack.c.l.b16 %v87
    %v346 = vunpack.c.l.b16 %v88
    %v347 = vunpack.c.l.b16 %v89
    %v348 = vunpack.c.l.b16 %v90
    %v349 = vunpack.c.l.b16 %v91
    %v350 = vunpack.c.l.b16 %v92
    %v351 = vunpack.c.l.b16 %v93
    %v352 = vunpack.c.l.b16 %v94
    %v353 = vunpack.c.l.b16 %v95
    %v354 = vunpack.c.l.b16 %v96
    %v355 = vunpack.c.l.b16 %v97
    %v356 = vunpack.c.l.b16 %v98
    %v357 = vunpack.c.l.b16 %v99
    %v358 = vunpack.c.l.b16 %v100
    %v359 = vunpack.c.l.b16 %v101
    %v360 = vunpack.c.l.b16 %v102
    %v361 = vunpack.c.l.b16 %v103
    %v362 = vunpack.c.l.b16 %v104
    %v363 = vunpack.c.l.b16 %v105
    %v364 = vunpack.c.l.b16 %v106
    %v365 = vunpack.c.l.b16 %v107
    %v366 = vunpack.c.l.b16 %v108
    %v367 = vunpack.c.l.b16 %v109
    %v368 = vunpack.c.l.b16 %v110
    %v369 = vunpack.c.l.b16 %v111
    %v370 = vunpack.c.l.b16 %v112
    %v371 = vunpack.c.l.b16 %v113
    %v372 = vunpack.c.l.b16 %v114
    %v373 = vunpack.c.l.b16 %v115
    %v374 = vunpack.c.l.b16 %v116
    %v375 = vunpack.c.l.b16 %v117
    %v376 = vunpack.c.l.b16 %v118
    %v377 = vunpack.c.l.b16 %v119
    %v378 = vunpack.c.l.b16 %v120
    %v379 = vunpack.c.l.b16 %v121
    %v380 = vunpack.c.l.b16 %v122
    %v381 = vunpack.c.l.b16 %v123
    %v382 = vunpack.c.l.b16 %v124
    %v383 = vunpack.c.l.b16 %v125
    %v384 = vunpack.c.l.b16 %v126
    %v385 = vunpack.c.l.b16 %v127
    %v386 = vunpack.c.l.b16 %v128
    %v387 = vunpack.c.l.b16 %v129
    %v388 = vunpack.c.l.b16 %v130
    %v389 = vunpack.c.l.b16 %v131
    %v390 = vunpack.c.l.b16 %v132
    %v391 = vunpack.c.l.b16 %v133
    %v392 = vunpack.c.l.b16 %v134
    %v393 = vunpack.c.l.b16 %v135
    %v394 = vunpack.c.l.b16 %v136
    %v395 = vunpack.c.l.b16 %v137
    %v396 = vunpack.c.l.b16 %v138
    %v397 = vunpack.c.l.b16 %v139
    %v398 = vunpack.c.l.b16 %v140
    %v399 = vunpack.c.l.b16 %v141
    %v400 = vunpack.c.l.b16 %v142
    %v401 = vunpack.c.l.b16 %v143
    %v402 = vunpack.c.l.b16 %v144
    %v403 = vunpack.c.l.b16 %v145
    %v404 = vunpack.c.l.b16 %v146
    %v405 = vunpack.c.l.b16 %v147
    %v406 = vunpack.c.l.b16 %v148
    %v407 = vunpack.c.l.b16 %v149
    %v408 = vunpack.c.l.b16 %v150
    %v409 = vunpack.c.l.b16 %v151
    %v410 = vunpack.c.l.b16 %v152
    %v411 = vunpack.c.l.b16 %v153
    %v412 = vunpack.c.l.b16 %v154
    %v413 = vunpack.c.l.b16 %v155
    %v414 = vunpack.c.l.b16 %v156
    %v415 = vunpack.c.l.b16 %v157
    %v416 = vunpack.c.l.b16 %v158
    %v417 = vunpack.c.l.b16 %v159
    %v418 = vunpack.c.l.b16 %v160
    %v419 = vunpack.c.l.b16 %v161
    %v420 = vunpack.c.l.b16 %v162
    %v421 = vunpack.c.l.b16 %v163
    %v422 = vunpack.c.l.b16 %v164
    %v423 = vunpack.c.l.b16 %v165
    %v424 = vunpack.c.l.b16 %v166
    %v425 = vunpack.c.l.b16 %v167
    %v426 = vunpack.c.l.b16 %v168
    %v427 = vunpack.c.l.b16 %v169
    %v428 = vunpack.c.l.b16 %v170
    %v429 = vunpack.c.l.b16 %v171
    %v430 = vunpack.c.l.b16 %v172
    %v431 = vunpack.c.l.b16 %v173
    %v432 = vunpack.c.l.b16 %v174
    %v433 = vunpack.c.l.b16 %v175
    %v434 = vunpack.c.l.b16 %v176
    %v435 = vunpack.c.l.b16 %v177
    %v436 = vunpack.c.l.b16 %v178
    %v437 = vunpack.c.l.b16 %v179
    %v438 = vpack.c.b16 %v341, %v340
    %v439 = vpack.c.b16 %v343, %v342
    %v440 = vpack.c.b16 %v345, %v344
    %v441 = vpack.c.b16 %v347, %v346
    %v442 = vpack.c.b16 %v349, %v348
    %v443 = vpack.c.b16 %v351, %v350
    %v444 = vpack.c.b16 %v353, %v352
    %v445 = vpack.c.b16 %v355, %v354
    %v446 = vpack.c.b16 %v357, %v356
    %v447 = vpack.c.b16 %v359, %v358
    %v448 = vpack.c.b16 %v361, %v360
    %v449 = vpack.c.b16 %v363, %v362
    %v450 = vpack.c.b16 %v365, %v364
    %v451 = vpack.c.b16 %v367, %v366
    %v452 = vpack.c.b16 %v369, %v368
    %v453 = vpack.c.b16 %v371, %v370
    %v454 = vpack.c.b16 %v373, %v372
    %v455 = vpack.c.b16 %v375, %v374
    %v456 = vpack.c.b16 %v377, %v376
    %v457 = vpack.c.b16 %v379, %v378
    %v458 = vpack.c.b16 %v381, %v380
    %v459 = vpack.c.b16 %v383, %v382
    %v460 = vpack.c.b16 %v385, %v384
    %v461 = vpack.c.b16 %v387, %v386
    %v462 = vpack.c.b16 %v389, %v388
    %v463 = vpack.c.b16 %v391, %v390
    %v464 = vpack.c.b16 %v393, %v392
    %v465 = vpack.c.b16 %v395, %v394
    %v466 = vpack.c.b16 %v397, %v396
    %v467 = vpack.c.b16 %v399, %v398
    %v468 = vpack.c.b16 %v401, %v400
    %v469 = vpack.c.b16 %v403, %v402
    %v470 = vpack.c.b16 %v405, %v404
    %v471 = vpack.c.b16 %v407, %v406
    %v472 = vpack.c.b16 %v409, %v408
    %v473 = vpack.c.b16 %v411, %v410
    %v474 = vpack.c.b16 %v413, %v412
    %v475 = vpack.c.b16 %v415, %v414
    %v476 = vpack.c.b16 %v417, %v416
    %v477 = vpack.c.b16 %v419, %v418
    %v478 = vpack.c.b16 %v421, %v420
    %v479 = vpack.c.b16 %v423, %v422
    %v480 = vpack.c.b16 %v425, %v424
    %v481 = vpack.c.b16 %v427, %v426
    %v482 = vpack.c.b16 %v429, %v428
    %v483 = vpack.c.b16 %v431, %v430
    %v484 = vpack.c.b16 %v433, %v432
    %v485 = vpack.c.b16 %v435, %v434
    %v486 = vpack.c.b16 %v437, %v436
    %vm536 = vcmask 130048
    %v538 = vsel %vm536, %v234, 0
    %540 = vmatprep.subr.bf16.mxu0 0
    %541 = vmatpush1.bf16.msra.mxu0 %v438
    %542 = vmatprep.subr.bf16.mxu0 0
    %543 = vmatpush1.bf16.msra.mxu0 %v439
    %544 = vmatprep.subr.bf16.mxu0 0
    %545 = vmatpush1.bf16.msra.mxu0 %v440
    %546 = vmatprep.subr.bf16.mxu0 0
    %547 = vmatpush1.bf16.msra.mxu0 %v441
    %548 = vmatprep.subr.bf16.mxu0 0
    %549 = vmatpush1.bf16.msra.mxu0 %v442
    %550 = vmatprep.subr.bf16.mxu0 0
    %551 = vmatpush1.bf16.msra.mxu0 %v443
    %552 = vmatprep.subr.bf16.mxu0 0
    %553 = vmatpush1.bf16.msra.mxu0 %v444
    %554 = vmatprep.subr.bf16.mxu0 0
    %555 = vmatpush1.bf16.msra.mxu0 %v445
    %556 = vmatprep.subr.bf16.mxu0 0
    %557 = vmatpush1.bf16.msra.mxu0 %v446
    %558 = vmatprep.subr.bf16.mxu0 0
    %559 = vmatpush1.bf16.msra.mxu0 %v447
    %560 = vmatprep.subr.bf16.mxu0 0
    %561 = vmatpush1.bf16.msra.mxu0 %v448
    %562 = vmatprep.subr.bf16.mxu0 0
    %563 = vmatpush1.bf16.msra.mxu0 %v449
    %564 = vmatprep.subr.bf16.mxu0 0
    %565 = vmatpush1.bf16.msra.mxu0 %v450
    %566 = vmatprep.subr.bf16.mxu0 0
    %567 = vmatpush1.bf16.msra.mxu0 %v451
    %568 = vmatprep.subr.bf16.mxu0 0
    %569 = vmatpush1.bf16.msra.mxu0 %v452
    %570 = vmatprep.subr.bf16.mxu0 0
    %571 = vmatpush1.bf16.msra.mxu0 %v453
    %572 = vmatprep.mubr.bf16.mxu0 %v225
    %573 = vmatmul.mubr.bf16.gmra.mrb[0].mxu0 %v211
    %v574 = vpop.f32.mrb[0].mxu0
    %v575 = vadd.f32 %v185, %v574
    %v576 = vpop.f32.mrb[0].mxu0
    %v577 = vpop.f32.mrb[0].mxu0
    %v578 = vpop.f32.mrb[0].mxu0
    %579 = vdwg.mxu0
    %580 = vmatprep.subr.bf16.mxu0 0
    %581 = vmatpush1.bf16.msra.mxu0 %v454
    %582 = vmatprep.subr.bf16.mxu0 0
    %583 = vmatpush1.bf16.msra.mxu0 %v455
    %584 = vmatprep.subr.bf16.mxu0 0
    %585 = vmatpush1.bf16.msra.mxu0 %v456
    %586 = vmatprep.subr.bf16.mxu0 0
    %587 = vmatpush1.bf16.msra.mxu0 %v457
    %588 = vmatprep.subr.bf16.mxu0 0
    %589 = vmatpush1.bf16.msra.mxu0 %v458
    %590 = vmatprep.subr.bf16.mxu0 0
    %591 = vmatpush1.bf16.msra.mxu0 %v459
    %592 = vmatprep.subr.bf16.mxu0 0
    %593 = vmatpush1.bf16.msra.mxu0 %v460
    %594 = vmatprep.subr.bf16.mxu0 0
    %595 = vmatpush1.bf16.msra.mxu0 %v461
    %596 = vmatprep.subr.bf16.mxu0 0
    %597 = vmatpush1.bf16.msra.mxu0 %v462
    %598 = vmatprep.subr.bf16.mxu0 0
    %599 = vmatpush1.bf16.msra.mxu0 %v463
    %600 = vmatprep.subr.bf16.mxu0 0
    %601 = vmatpush1.bf16.msra.mxu0 %v464
    %602 = vmatprep.subr.bf16.mxu0 0
    %603 = vmatpush1.bf16.msra.mxu0 %v465
    %604 = vmatprep.subr.bf16.mxu0 0
    %605 = vmatpush1.bf16.msra.mxu0 %v466
    %606 = vmatprep.subr.bf16.mxu0 0
    %607 = vmatpush1.bf16.msra.mxu0 %v467
    %608 = vmatprep.subr.bf16.mxu0 0
    %609 = vmatpush1.bf16.msra.mxu0 %v468
    %610 = vmatprep.subr.bf16.mxu0 0
    %611 = vmatpush1.bf16.msra.mxu0 %v469
    %612 = vmatprep.mubr.bf16.mxu0 %v235
    %613 = vmatmul.mubr.bf16.gmra.mrb[0].mxu0 %v233
    %v614 = vpop.f32.mrb[0].mxu0
    %v615 = vadd.f32 %v575, %v614
    %v616 = vpop.f32.mrb[0].mxu0
    %v617 = vpop.f32.mrb[0].mxu0
    %v618 = vpop.f32.mrb[0].mxu0
    %619 = vdwg.mxu0
    %620 = vmatprep.subr.bf16.mxu0 0
    %621 = vmatpush1.bf16.msra.mxu0 %v470
    %622 = vmatprep.subr.bf16.mxu0 0
    %623 = vmatpush1.bf16.msra.mxu0 %v471
    %624 = vmatprep.subr.bf16.mxu0 0
    %625 = vmatpush1.bf16.msra.mxu0 %v472
    %626 = vmatprep.subr.bf16.mxu0 0
    %627 = vmatpush1.bf16.msra.mxu0 %v473
    %628 = vmatprep.subr.bf16.mxu0 0
    %629 = vmatpush1.bf16.msra.mxu0 %v474
    %630 = vmatprep.subr.bf16.mxu0 0
    %631 = vmatpush1.bf16.msra.mxu0 %v475
    %632 = vmatprep.subr.bf16.mxu0 0
    %633 = vmatpush1.bf16.msra.mxu0 %v476
    %634 = vmatprep.subr.bf16.mxu0 0
    %635 = vmatpush1.bf16.msra.mxu0 %v477
    %636 = vmatprep.subr.bf16.mxu0 0
    %637 = vmatpush1.bf16.msra.mxu0 %v478
    %638 = vmatprep.subr.bf16.mxu0 0
    %639 = vmatpush1.bf16.msra.mxu0 %v479
    %640 = vmatprep.subr.bf16.mxu0 0
    %641 = vmatpush1.bf16.msra.mxu0 %v480
    %642 = vmatprep.subr.bf16.mxu0 0
    %643 = vmatpush1.bf16.msra.mxu0 %v481
    %644 = vmatprep.subr.bf16.mxu0 0
    %645 = vmatpush1.bf16.msra.mxu0 %v482
    %646 = vmatprep.subr.bf16.mxu0 0
    %647 = vmatpush1.bf16.msra.mxu0 %v483
    %648 = vmatprep.subr.bf16.mxu0 0
    %649 = vmatpush1.bf16.msra.mxu0 %v484
    %650 = vmatprep.subr.bf16.mxu0 0
    %651 = vmatpush1.bf16.msra.mxu0 %v485
    %652 = vmatprep.mubr.bf16.mxu0 %v232
    %653 = vmatmul.mubr.bf16.gmra.mrb[0].mxu0 %v218
    %v654 = vpop.f32.mrb[0].mxu0
    %v655 = vadd.f32 %v615, %v654
    %v656 = vpop.f32.mrb[0].mxu0
    %v657 = vpop.f32.mrb[0].mxu0
    %v658 = vpop.f32.mrb[0].mxu0
    %659 = vdwg.mxu0
    %660 = vmatprep.subr.bf16.mxu0 0
    %661 = vmatpush1.bf16.msra.mxu0 %v486
    %662 = vmatprep.subr.bf16.mxu0 0
    %663 = vmatpush1.bf16.msra.mxu0 0
    %664 = vmatprep.subr.bf16.mxu0 0
    %665 = vmatpush1.bf16.msra.mxu0 0
    %666 = vmatprep.subr.bf16.mxu0 0
    %667 = vmatpush1.bf16.msra.mxu0 0
    %668 = vmatprep.subr.bf16.mxu0 0
    %669 = vmatpush1.bf16.msra.mxu0 0
    %670 = vmatprep.subr.bf16.mxu0 0
    %671 = vmatpush1.bf16.msra.mxu0 0
    %672 = vmatprep.subr.bf16.mxu0 0
    %673 = vmatpush1.bf16.msra.mxu0 0
    %674 = vmatprep.subr.bf16.mxu0 0
    %675 = vmatpush1.bf16.msra.mxu0 0
    %676 = vmatprep.subr.bf16.mxu0 0
    %677 = vmatpush1.bf16.msra.mxu0 0
    %678 = vmatprep.subr.bf16.mxu0 0
    %679 = vmatpush1.bf16.msra.mxu0 0
    %680 = vmatprep.subr.bf16.mxu0 0
    %681 = vmatpush1.bf16.msra.mxu0 0
    %682 = vmatprep.subr.bf16.mxu0 0
    %683 = vmatpush1.bf16.msra.mxu0 0
    %684 = vmatprep.subr.bf16.mxu0 0
    %685 = vmatpush1.bf16.msra.mxu0 0
    %686 = vmatprep.subr.bf16.mxu0 0
    %687 = vmatpush1.bf16.msra.mxu0 0
    %688 = vmatprep.subr.bf16.mxu0 0
    %689 = vmatpush1.bf16.msra.mxu0 0
    %690 = vmatprep.subr.bf16.mxu0 0
    %691 = vmatpush1.bf16.msra.mxu0 0
    %692 = vmatprep.mubr.bf16.mxu0 0
    %693 = vmatmul.mubr.bf16.gmra.mrb[0].mxu0 %v538
    %v694 = vpop.f32.mrb[0].mxu0
    %v695 = vadd.f32 %v655, %v694
    %v696 = vpop.f32.mrb[0].mxu0
    %v697 = vpop.f32.mrb[0].mxu0
    %v698 = vpop.f32.mrb[0].mxu0
    %699 = vdwg.mxu0
    %v700 = vpack.c.bf16 %v695, %v695
    %v701 = vld [vmem:[#allocation7] sm:$0xf]
    %v702 = vld [vmem:[#allocation7 + $0x4] sm:$0xf]
    %v703 = vld [vmem:[#allocation7 + $0x8] sm:$0xf]
    %v704 = vld [vmem:[#allocation7 + $0xc] sm:$0xf]
    %v705 = vld [vmem:[#allocation7 + $0x10] sm:$0xf]
    %v706 = vld [vmem:[#allocation7 + $0x14] sm:$0xf]
    %v707 = vld [vmem:[#allocation7 + $0x18] sm:$0xf]
    %v708 = vld [vmem:[#allocation7 + $0x1c] sm:$0xf]
    %v709 = vld [vmem:[#allocation7 + $0x20] sm:$0xf]
    %v710 = vld [vmem:[#allocation7 + $0x24] sm:$0xf]
    %v711 = vld [vmem:[#allocation7 + $0x28] sm:$0xf]
    %v712 = vld [vmem:[#allocation7 + $0x2c] sm:$0xf]
    %v713 = vld [vmem:[#allocation7 + $0x30] sm:$0xf]
    %v714 = vld [vmem:[#allocation7 + $0x34] sm:$0xf]
    %v715 = vld [vmem:[#allocation7 + $0x38] sm:$0xf]
    %v716 = vld [vmem:[#allocation7 + $0x3c] sm:$0xf]
    %v717 = vld [vmem:[%s4] sm:$0x1]
    %v719 = vlaneseq
    %v720 = vshrl.u32 %v719, 7
    %v721 = vsub.s32 0, %v720
    %v722 = vrot.slane %v717, %v721
    %v740 = vunpack.c.l.b16 %v701
    %v741 = vunpack.c.l.b16 %v702
    %v742 = vunpack.c.l.b16 %v703
    %v743 = vunpack.c.l.b16 %v704
    %v744 = vunpack.c.l.b16 %v705
    %v745 = vunpack.c.l.b16 %v706
    %v746 = vunpack.c.l.b16 %v707
    %v747 = vunpack.c.l.b16 %v708
    %v748 = vunpack.c.l.b16 %v709
    %v749 = vunpack.c.l.b16 %v710
    %v750 = vunpack.c.l.b16 %v711
    %v751 = vunpack.c.l.b16 %v712
    %v752 = vunpack.c.l.b16 %v713
    %v753 = vunpack.c.l.b16 %v714
    %v754 = vunpack.c.l.b16 %v715
    %v755 = vunpack.c.l.b16 %v716
    %v756 = vpack.c.b16 %v741, %v740
    %v757 = vpack.c.b16 %v743, %v742
    %v758 = vpack.c.b16 %v745, %v744
    %v759 = vpack.c.b16 %v747, %v746
    %v760 = vpack.c.b16 %v749, %v748
    %v761 = vpack.c.b16 %v751, %v750
    %v762 = vpack.c.b16 %v753, %v752
    %v763 = vpack.c.b16 %v755, %v754
    %772 = vmatprep.subr.bf16.mxu0 0
    %773 = vmatpush1.bf16.msra.mxu0 %v756
    %774 = vmatprep.subr.bf16.mxu0 0
    %775 = vmatpush1.bf16.msra.mxu0 %v757
    %776 = vmatprep.subr.bf16.mxu0 0
    %777 = vmatpush1.bf16.msra.mxu0 %v758
    %778 = vmatprep.subr.bf16.mxu0 0
    %779 = vmatpush1.bf16.msra.mxu0 %v759
    %780 = vmatprep.subr.bf16.mxu0 0
    %781 = vmatpush1.bf16.msra.mxu0 %v760
    %782 = vmatprep.subr.bf16.mxu0 0
    %783 = vmatpush1.bf16.msra.mxu0 %v761
    %784 = vmatprep.subr.bf16.mxu0 0
    %785 = vmatpush1.bf16.msra.mxu0 %v762
    %786 = vmatprep.subr.bf16.mxu0 0
    %787 = vmatpush1.bf16.msra.mxu0 %v763
    %788 = vmatprep.subr.bf16.mxu0 0
    %789 = vmatpush1.bf16.msra.mxu0 0
    %790 = vmatprep.subr.bf16.mxu0 0
    %791 = vmatpush1.bf16.msra.mxu0 0
    %792 = vmatprep.subr.bf16.mxu0 0
    %793 = vmatpush1.bf16.msra.mxu0 0
    %794 = vmatprep.subr.bf16.mxu0 0
    %795 = vmatpush1.bf16.msra.mxu0 0
    %796 = vmatprep.subr.bf16.mxu0 0
    %797 = vmatpush1.bf16.msra.mxu0 0
    %798 = vmatprep.subr.bf16.mxu0 0
    %799 = vmatpush1.bf16.msra.mxu0 0
    %800 = vmatprep.subr.bf16.mxu0 0
    %801 = vmatpush1.bf16.msra.mxu0 0
    %802 = vmatprep.subr.bf16.mxu0 0
    %803 = vmatpush1.bf16.msra.mxu0 0
    %804 = vmatprep.mubr.bf16.mxu0 0
    %805 = vmatmul.mubr.bf16.gmra.mrb[0].mxu0 %v700
    %v806 = vpop.f32.mrb[0].mxu0
    %v807 = vadd.f32 %v722, %v806
    %v808 = vpop.f32.mrb[0].mxu0
    %v809 = vpop.f32.mrb[0].mxu0
    %v810 = vpop.f32.mrb[0].mxu0
    %811 = vdwg.mxu0
    %v812 = vmax.f32 %v807, 0.0
    %v813 = vpack.c.bf16 %v812, %v812
    %v814 = vld [vmem:[#allocation8] sm:$0xf]
    %v815 = vld [vmem:[#allocation8 + $0x4] sm:$0xf]
    %v816 = vld [vmem:[#allocation8 + $0x8] sm:$0xf]
    %v817 = vld [vmem:[#allocation8 + $0xc] sm:$0xf]
    %v818 = vld [vmem:[#allocation8 + $0x10] sm:$0xf]
    %v819 = vld [vmem:[#allocation8 + $0x14] sm:$0xf]
    %v820 = vld [vmem:[#allocation8 + $0x18] sm:$0xf]
    %v821 = vld [vmem:[#allocation8 + $0x1c] sm:$0xf]
    %v822 = vld [vmem:[#allocation8 + $0x20] sm:$0xf]
    %v823 = vld [vmem:[#allocation8 + $0x24] sm:$0xf]
    %v824 = vld [vmem:[#allocation8 + $0x28] sm:$0xf]
    %v825 = vld [vmem:[#allocation8 + $0x2c] sm:$0xf]
    %v826 = vld [vmem:[#allocation8 + $0x30] sm:$0xf]
    %v827 = vld [vmem:[#allocation8 + $0x34] sm:$0xf]
    %v828 = vld [vmem:[#allocation8 + $0x38] sm:$0xf]
    %v829 = vld [vmem:[#allocation8 + $0x3c] sm:$0xf]
    %v830 = vld [vmem:[%s6] sm:$0x1]
    %v832 = vlaneseq
    %v833 = vshrl.u32 %v832, 7
    %v834 = vsub.s32 0, %v833
    %v835 = vrot.slane %v830, %v834
    %v853 = vunpack.c.l.b16 %v814
    %v854 = vunpack.c.l.b16 %v815
    %v855 = vunpack.c.l.b16 %v816
    %v856 = vunpack.c.l.b16 %v817
    %v857 = vunpack.c.l.b16 %v818
    %v858 = vunpack.c.l.b16 %v819
    %v859 = vunpack.c.l.b16 %v820
    %v860 = vunpack.c.l.b16 %v821
    %v861 = vunpack.c.l.b16 %v822
    %v862 = vunpack.c.l.b16 %v823
    %v863 = vunpack.c.l.b16 %v824
    %v864 = vunpack.c.l.b16 %v825
    %v865 = vunpack.c.l.b16 %v826
    %v866 = vunpack.c.l.b16 %v827
    %v867 = vunpack.c.l.b16 %v828
    %v868 = vunpack.c.l.b16 %v829
    %v869 = vpack.c.b16 %v854, %v853
    %v870 = vpack.c.b16 %v856, %v855
    %v871 = vpack.c.b16 %v858, %v857
    %v872 = vpack.c.b16 %v860, %v859
    %v873 = vpack.c.b16 %v862, %v861
    %v874 = vpack.c.b16 %v864, %v863
    %v875 = vpack.c.b16 %v866, %v865
    %v876 = vpack.c.b16 %v868, %v867
    %885 = vmatprep.subr.bf16.mxu0 0
    %886 = vmatpush1.bf16.msra.mxu0 %v869
    %887 = vmatprep.subr.bf16.mxu0 0
    %888 = vmatpush1.bf16.msra.mxu0 %v870
    %889 = vmatprep.subr.bf16.mxu0 0
    %890 = vmatpush1.bf16.msra.mxu0 %v871
    %891 = vmatprep.subr.bf16.mxu0 0
    %892 = vmatpush1.bf16.msra.mxu0 %v872
    %893 = vmatprep.subr.bf16.mxu0 0
    %894 = vmatpush1.bf16.msra.mxu0 %v873
    %895 = vmatprep.subr.bf16.mxu0 0
    %896 = vmatpush1.bf16.msra.mxu0 %v874
    %897 = vmatprep.subr.bf16.mxu0 0
    %898 = vmatpush1.bf16.msra.mxu0 %v875
    %899 = vmatprep.subr.bf16.mxu0 0
    %900 = vmatpush1.bf16.msra.mxu0 %v876
    %901 = vmatprep.subr.bf16.mxu0 0
    %902 = vmatpush1.bf16.msra.mxu0 0
    %903 = vmatprep.subr.bf16.mxu0 0
    %904 = vmatpush1.bf16.msra.mxu0 0
    %905 = vmatprep.subr.bf16.mxu0 0
    %906 = vmatpush1.bf16.msra.mxu0 0
    %907 = vmatprep.subr.bf16.mxu0 0
    %908 = vmatpush1.bf16.msra.mxu0 0
    %909 = vmatprep.subr.bf16.mxu0 0
    %910 = vmatpush1.bf16.msra.mxu0 0
    %911 = vmatprep.subr.bf16.mxu0 0
    %912 = vmatpush1.bf16.msra.mxu0 0
    %913 = vmatprep.subr.bf16.mxu0 0
    %914 = vmatpush1.bf16.msra.mxu0 0
    %915 = vmatprep.subr.bf16.mxu0 0
    %916 = vmatpush1.bf16.msra.mxu0 0
    %917 = vmatprep.mubr.bf16.mxu0 0
    %918 = vmatmul.mubr.bf16.gmra.mrb[0].mxu0 %v813
    %v919 = vpop.f32.mrb[0].mxu0
    %v920 = vadd.f32 %v835, %v919
    %v921 = vpop.f32.mrb[0].mxu0
    %v922 = vpop.f32.mrb[0].mxu0
    %v923 = vpop.f32.mrb[0].mxu0
    %924 = vdwg.mxu0
    %925 = vst [vmem:[#allocation10] sm:$0x3] %v920
    // Predicated region
    $region46: #{tpu_custom_call.1} parent=1 // pred_check
      _
    $region47: #{tpu_custom_call.1} parent=1 // pred_check_branch
      %927 = sbr.rel (0) target = $region49
    $region48: #{tpu_custom_call.1} parent=1 // pred_region
      %s929 = ssub.s32 32, 32
      %930 = vsyncadd [#allocation4], %s929
      %s932 = sshll.u32 [#allocation10], 4
      %s933 = int_to_ptr.vmem [resolvable:$true] %s932
      %935 = dma.vmem_to_hbm [thread:$0]  %s933, 32, %s7, [#allocation4]
    $region49: #{tpu_custom_call.1} parent=1 // pred_fallthru
      _
    // Predicated region
    $region50: #{tpu_custom_call.1} parent=1 // pred_check
      _
    $region51: #{tpu_custom_call.1} parent=1 // pred_check_branch
      %937 = sbr.rel (0) target = $region53
    $region52: #{tpu_custom_call.1} parent=1 // pred_region
      %938 = dma.done [#allocation4], 32
    $region53: #{tpu_custom_call.1} parent=1 // pred_fallthru
      _
    %939 = vsyncpa [#allocation3], 1
    %940 = vsyncpa [#allocation6], 1
    %941 = vsyncpa [#allocation9], 1
    %942 = vsyncpa [#allocation4], 1

</llo_original>
